<compile_context>
chip_gen: v7x
topology: tpu7x:2x2x1
jax: 0.10.0
libtpu: 0.0.40
codegen_flags: <defaults>
</compile_context>

<pallas_src>
import jax
import jax.numpy as jnp
from jax.experimental import pallas as pl
from jax.experimental.pallas import tpu as pltpu

# Deterministic "config" values (config.barlow_twins.* is not available):
LAMBDA_PARAM = 5e-3      # standard Barlow Twins lambda
SCALE_LOSS = 0.025       # standard Barlow Twins loss scale
BN_EPS = 1e-5            # nn.BatchNorm1d default eps


def _make_kernel(d_orig, tile_d, lambda_param, scale_loss):
    lam_scale = lambda_param * scale_loss

    def kernel(za_ref, zb_ref, out_ref, acc_ref):
        i = pl.program_id(0)
        j = pl.program_id(1)
        nj = pl.num_programs(1)

        @pl.when(j == 0)
        def _init():
            acc_ref[...] = jnp.zeros_like(acc_ref)

        # (N_pad, tD) bf16 slabs; contract over the batch axis (dim 0) so no
        # transposed copy of z_a is ever materialized.  1/N is already folded
        # into za, so this *is* the c-tile of bn(z_a).T @ bn(z_b) / N.
        c = jax.lax.dot_general(
            za_ref[...],
            zb_ref[...],
            dimension_numbers=(((0,), (0,)), ((), ())),
            preferred_element_type=jnp.float32,
        )
        total_sq = jnp.sum(c * c)

        @pl.when(i != j)
        def _off_tile():
            # Pure square-and-sum: no iota / mask on off-diagonal tiles.
            acc_ref[...] += lam_scale * total_sq

        @pl.when(i == j)
        def _diag_tile():
            row = jax.lax.broadcasted_iota(jnp.int32, (tile_d, tile_d), 0)
            col = jax.lax.broadcasted_iota(jnp.int32, (tile_d, tile_d), 1)
            diag_c = jnp.where(row == col, c, 0.0)
            diag_sq = jnp.sum(diag_c * diag_c)
            diag_lin = jnp.sum(diag_c)
            # Number of real (un-padded) diagonal entries in this tile; padded
            # diagonal entries have c_kk == 0 exactly, so they only need to be
            # excluded from the "+1 per diagonal entry" term.
            valid = jnp.minimum(d_orig - i * tile_d, tile_d).astype(jnp.float32)
            on_contrib = diag_sq - 2.0 * diag_lin + valid   # sum (c_kk - 1)^2
            off_contrib = total_sq - diag_sq
            acc_ref[...] += scale_loss * on_contrib + lam_scale * off_contrib

        @pl.when(j == nj - 1)
        def _finalize():
            # Lane-dense, unmasked write, once per row block (not per step).
            out_ref[...] = jnp.broadcast_to(acc_ref[...], out_ref.shape)

    return kernel


def _batch_norm(x, eps=BN_EPS):
    # nn.BatchNorm1d(affine=False), training-mode forward: per-feature mean
    # and *biased* variance over the batch axis.
    x = x.astype(jnp.float32)
    mean = jnp.mean(x, axis=0, keepdims=True)
    var = jnp.mean(jnp.square(x - mean), axis=0, keepdims=True)
    return (x - mean) * jax.lax.rsqrt(var + eps)


def barlow_twins_loss(z_a, z_b, *, lambda_param=LAMBDA_PARAM,
                      scale_loss=SCALE_LOSS, tile_d=256):
    """Barlow Twins loss; the DxD correlation is computed tile-by-tile on TPU."""
    assert z_a.shape == z_b.shape and z_a.ndim == 2
    assert tile_d % 128 == 0
    n, d = z_a.shape

    # BN (+ 1/N fold into z_a) in the wrapper; bf16 operands, f32 accumulation.
    za_n = (_batch_norm(z_a) * (1.0 / n)).astype(jnp.bfloat16)
    zb_n = _batch_norm(z_b).astype(jnp.bfloat16)

    # Pad features to a multiple of tile_d (lanes) and batch to a multiple of
    # 16 (bf16 sublane packing).  Padding zeros on *normalized* data is exact:
    # it contributes nothing to the cross-correlation.
    d_pad = pl.cdiv(d, tile_d) * tile_d
    n_pad = pl.cdiv(n, 16) * 16
    za_n = jnp.pad(za_n, ((0, n_pad - n), (0, d_pad - d)))
    zb_n = jnp.pad(zb_n, ((0, n_pad - n), (0, d_pad - d)))

    gi = gj = d_pad // tile_d
    kernel = _make_kernel(d, tile_d, float(lambda_param), float(scale_loss))

    partials = pl.pallas_call(
        kernel,
        out_shape=jax.ShapeDtypeStruct((gi * 8, 128), jnp.float32),
        grid_spec=pltpu.PrefetchScalarGridSpec(
            num_scalar_prefetch=0,
            grid=(gi, gj),
            in_specs=[
                pl.BlockSpec((n_pad, tile_d), lambda i, j: (0, i)),  # z_a slab
                pl.BlockSpec((n_pad, tile_d), lambda i, j: (0, j)),  # z_b slab
            ],
            out_specs=pl.BlockSpec((8, 128), lambda i, j: (i, 0)),
            scratch_shapes=[pltpu.VMEM((1, 1), jnp.float32)],
        ),
        compiler_params=pltpu.CompilerParams(
            dimension_semantics=("parallel", "arbitrary"),
            vmem_limit_bytes=32 * 1024 * 1024,
        ),
    )(za_n, zb_n)

    # Each (8, 128) row block holds one row-block's partial loss (broadcast);
    # pick one element per block and sum on the host/XLA side.
    return jnp.sum(partials[::8, 0])


def _reference_loss(z_a, z_b, lambda_param=LAMBDA_PARAM, scale_loss=SCALE_LOSS):
    # Pure-JAX reference mirroring the PyTorch forward.
    n = z_a.shape[0]
    c = _batch_norm(z_a).T @ _batch_norm(z_b) / n
    diag = jnp.diagonal(c)
    on = jnp.sum((diag - 1.0) ** 2) * scale_loss
    off = (jnp.sum(c * c) - jnp.sum(diag * diag)) * scale_loss
    return on + lambda_param * off


if __name__ == "__main__":
    key = jax.random.PRNGKey(0)
    ka, kb = jax.random.split(key)

    # Small shapes: (batch=8, proj_dim=256) exercises a 2x2 grid with both
    # diagonal and off-diagonal tiles; (8, 32) exercises the D-padding path.
    for (N, D, tile) in [(8, 256, 128), (8, 32, 128)]:
        z_a = jax.random.normal(ka, (N, D), dtype=jnp.float32)
        z_b = jax.random.normal(kb, (N, D), dtype=jnp.float32)

        loss = barlow_twins_loss(z_a, z_b, tile_d=tile)
        jax.block_until_ready(loss)

        ref = _reference_loss(z_a, z_b)
        # bf16 matmul operands vs f32 reference -> loose-ish tolerance.
        assert jnp.allclose(loss, ref, rtol=2e-2, atol=1e-3), (N, D, loss, ref)

    print("KERNEL_OK")
</pallas_src>

<mosaic_0001>
module attributes {stable_mosaic.version = 11 : i64} {
  func.func @kernel(%arg0: i32, %arg1: i32, %arg2: memref<16x128xbf16, #tpu.memory_space<vmem>>, %arg3: memref<16x128xbf16, #tpu.memory_space<vmem>>, %arg4: memref<8x128xf32, #tpu.memory_space<vmem>>, %arg5: memref<1x1xf32, #tpu.memory_space<vmem>>) attributes {dimension_semantics = [#tpu.dimension_semantics<parallel>, #tpu.dimension_semantics<arbitrary>], iteration_bounds = array<i64: 2, 2>, scalar_prefetch = 0 : i64, scratch_operands = 1 : i64, tpu.core_type = #tpu.core_type<tc>, window_params = [{transform_indices = @transform_0, window_bounds = array<i64: 16, 128>}, {transform_indices = @transform_1, window_bounds = array<i64: 16, 128>}, {transform_indices = @transform_2, window_bounds = array<i64: 8, 128>}]} {
    %c0_i32 = arith.constant 0 : i32
    %0 = arith.cmpi eq, %arg1, %c0_i32 : i32
    %1 = arith.extui %0 : i1 to i32
    %c0_i32_0 = arith.constant 0 : i32
    %2 = arith.cmpi ne, %1, %c0_i32_0 : i32
    scf.if %2 {
      %cst_8 = arith.constant 0.000000e+00 : f32
      %20 = vector.broadcast %cst_8 : f32 to vector<1x1xf32>
      %c0_9 = arith.constant 0 : index
      %c0_10 = arith.constant 0 : index
      %21 = vector.load %arg5[%c0_9, %c0_10] : memref<1x1xf32, #tpu.memory_space<vmem>>, vector<1x1xf32>
      tpu.vector_store %arg5[%c0_9, %c0_10], %20 {strides = array<i32>} : memref<1x1xf32, #tpu.memory_space<vmem>>, vector<1x1xf32>,
    } else {
    }
    %c0 = arith.constant 0 : index
    %c0_1 = arith.constant 0 : index
    %3 = vector.load %arg2[%c0, %c0_1] : memref<16x128xbf16, #tpu.memory_space<vmem>>, vector<16x128xbf16>
    %c0_2 = arith.constant 0 : index
    %c0_3 = arith.constant 0 : index
    %4 = vector.load %arg3[%c0_2, %c0_3] : memref<16x128xbf16, #tpu.memory_space<vmem>>, vector<16x128xbf16>
    %cst = arith.constant dense<0.000000e+00> : vector<128x128xf32>
    %5 = tpu.matmul %3, %4, %cst {dimension_numbers = #tpu.dot_dimension_numbers<[0], [0], [1], [1], [0, 1, 1, 1], [], []>} : vector<16x128xbf16>, vector<16x128xbf16>, vector<128x128xf32> -> vector<128x128xf32>
    %6 = arith.mulf %5, %5 : vector<128x128xf32>
    %7 = vector.shape_cast %6 : vector<128x128xf32> to vector<1x128x128xf32>
    %cst_4 = arith.constant dense<0.000000e+00> : vector<1xf32>
    %8 = vector.multi_reduction <add>, %7, %cst_4 [1, 2] : vector<1x128x128xf32> to vector<1xf32>
    %9 = vector.shape_cast %8 : vector<1xf32> to vector<1x1x1xf32>
    %10 = vector.extract %9[0, 0, 0] : f32 from vector<1x1x1xf32>
    %11 = arith.cmpi ne, %arg0, %arg1 : i32
    %12 = arith.extui %11 : i1 to i32
    %c0_i32_5 = arith.constant 0 : i32
    %13 = arith.cmpi ne, %12, %c0_i32_5 : i32
    scf.if %13 {
      %c0_8 = arith.constant 0 : index
      %c0_9 = arith.constant 0 : index
      %20 = vector.load %arg5[%c0_8, %c0_9] : memref<1x1xf32, #tpu.memory_space<vmem>>, vector<1x1xf32>
      %cst_10 = arith.constant 1.250000e-04 : f32
      %21 = arith.mulf %cst_10, %10 : f32
      %22 = vector.broadcast %21 : f32 to vector<1x1xf32>
      %23 = arith.addf %20, %22 : vector<1x1xf32>
      %c0_11 = arith.constant 0 : index
      %c0_12 = arith.constant 0 : index
      %24 = vector.load %arg5[%c0_11, %c0_12] : memref<1x1xf32, #tpu.memory_space<vmem>>, vector<1x1xf32>
      tpu.vector_store %arg5[%c0_11, %c0_12], %23 {strides = array<i32>} : memref<1x1xf32, #tpu.memory_space<vmem>>, vector<1x1xf32>,
    } else {
    }
    %14 = arith.cmpi eq, %arg0, %arg1 : i32
    %15 = arith.extui %14 : i1 to i32
    %c0_i32_6 = arith.constant 0 : i32
    %16 = arith.cmpi ne, %15, %c0_i32_6 : i32
    scf.if %16 {
      %20 = tpu.iota {dimensions = array<i32: 0>} : vector<128x128xi32>
      %21 = tpu.iota {dimensions = array<i32: 1>} : vector<128x128xi32>
      %22 = arith.cmpi eq, %20, %21 : vector<128x128xi32>
      %cst_8 = arith.constant 0.000000e+00 : f32
      %23 = vector.broadcast %cst_8 : f32 to vector<128x128xf32>
      %24 = arith.select %22, %5, %23 : vector<128x128xi1>, vector<128x128xf32>
      %25 = arith.mulf %24, %24 : vector<128x128xf32>
      %26 = vector.shape_cast %25 : vector<128x128xf32> to vector<1x128x128xf32>
      %cst_9 = arith.constant dense<0.000000e+00> : vector<1xf32>
      %27 = vector.multi_reduction <add>, %26, %cst_9 [1, 2] : vector<1x128x128xf32> to vector<1xf32>
      %28 = vector.shape_cast %27 : vector<1xf32> to vector<1x1x1xf32>
      %29 = vector.extract %28[0, 0, 0] : f32 from vector<1x1x1xf32>
      %30 = vector.shape_cast %24 : vector<128x128xf32> to vector<1x128x128xf32>
      %cst_10 = arith.constant dense<0.000000e+00> : vector<1xf32>
      %31 = vector.multi_reduction <add>, %30, %cst_10 [1, 2] : vector<1x128x128xf32> to vector<1xf32>
      %32 = vector.shape_cast %31 : vector<1xf32> to vector<1x1x1xf32>
      %33 = vector.extract %32[0, 0, 0] : f32 from vector<1x1x1xf32>
      %c128_i32 = arith.constant 128 : i32
      %34 = arith.muli %arg0, %c128_i32 : i32
      %c256_i32 = arith.constant 256 : i32
      %35 = arith.subi %c256_i32, %34 : i32
      %c128_i32_11 = arith.constant 128 : i32
      %36 = arith.minsi %35, %c128_i32_11 : i32
      %37 = arith.sitofp %36 : i32 to f32
      %cst_12 = arith.constant 2.000000e+00 : f32
      %38 = arith.mulf %cst_12, %33 : f32
      %39 = arith.subf %29, %38 : f32
      %40 = arith.addf %39, %37 : f32
      %41 = arith.subf %10, %29 : f32
      %c0_13 = arith.constant 0 : index
      %c0_14 = arith.constant 0 : index
      %42 = vector.load %arg5[%c0_13, %c0_14] : memref<1x1xf32, #tpu.memory_space<vmem>>, vector<1x1xf32>
      %cst_15 = arith.constant 2.500000e-02 : f32
      %43 = arith.mulf %cst_15, %40 : f32
      %cst_16 = arith.constant 1.250000e-04 : f32
      %44 = arith.mulf %cst_16, %41 : f32
      %45 = arith.addf %43, %44 : f32
      %46 = vector.broadcast %45 : f32 to vector<1x1xf32>
      %47 = arith.addf %42, %46 : vector<1x1xf32>
      %c0_17 = arith.constant 0 : index
      %c0_18 = arith.constant 0 : index
      %48 = vector.load %arg5[%c0_17, %c0_18] : memref<1x1xf32, #tpu.memory_space<vmem>>, vector<1x1xf32>
      tpu.vector_store %arg5[%c0_17, %c0_18], %47 {strides = array<i32>} : memref<1x1xf32, #tpu.memory_space<vmem>>, vector<1x1xf32>,
    } else {
    }
    %c1_i32 = arith.constant 1 : i32
    %17 = arith.cmpi eq, %arg1, %c1_i32 : i32
    %18 = arith.extui %17 : i1 to i32
    %c0_i32_7 = arith.constant 0 : i32
    %19 = arith.cmpi ne, %18, %c0_i32_7 : i32
    scf.if %19 {
      %c0_8 = arith.constant 0 : index
      %c0_9 = arith.constant 0 : index
      %20 = vector.load %arg5[%c0_8, %c0_9] : memref<1x1xf32, #tpu.memory_space<vmem>>, vector<1x1xf32>
      %21 = vector.shape_cast %20 : vector<1x1xf32> to vector<1x1xf32>
      %22 = vector.broadcast %21 : vector<1x1xf32> to vector<8x128xf32>
      %c0_10 = arith.constant 0 : index
      %c0_11 = arith.constant 0 : index
      %23 = vector.load %arg4[%c0_10, %c0_11] : memref<8x128xf32, #tpu.memory_space<vmem>>, vector<8x128xf32>
      tpu.vector_store %arg4[%c0_10, %c0_11], %22 {strides = array<i32>} : memref<8x128xf32, #tpu.memory_space<vmem>>, vector<8x128xf32>,
    } else {
    }
    return
  }
  func.func @transform_0(%arg0: i32, %arg1: i32) -> (i32, i32) {
    %c0_i32 = arith.constant 0 : i32
    %c0_i32_0 = arith.constant 0 : i32
    return %c0_i32, %arg0 : i32, i32
  }
  func.func @transform_1(%arg0: i32, %arg1: i32) -> (i32, i32) {
    %c0_i32 = arith.constant 0 : i32
    %c0_i32_0 = arith.constant 0 : i32
    return %c0_i32, %arg1 : i32, i32
  }
  func.func @transform_2(%arg0: i32, %arg1: i32) -> (i32, i32) {
    %c0_i32 = arith.constant 0 : i32
    %c0_i32_0 = arith.constant 0 : i32
    return %arg0, %c0_i32 : i32, i32
  }
}

</mosaic_0001>

<llo_original>
// kernel: tpu_custom_call.1
$region0: #{tpu_custom_call.1}
  #allocation0 [shape = 'u32[]', space=smem, size = 0x4, offset = 0x4, fixed_abs, tag = 'smem constant byte address 0x4 - core index']
  #allocation1 [shape = 'u32[144,128]{1,0:T(1,128)}', space=vmem, size = 0x12000, scoped, tag = 'internal scratch']
  #allocation2 [shape = 'f32[1,1]{1,0:T(1,128)}', space=vmem, size = 0x200, scoped, tag = 'scratch operand']
  %s0 = inlined_call_operand.hbm [shape: bf16[16,256], index: 0, kind: input, shape index: {}]
  %s1 = inlined_call_operand.hbm [shape: bf16[16,256], index: 1, kind: input, shape index: {}]
  %s2 = inlined_call_operand.hbm [shape: f32[16,128], index: 2, kind: output, shape index: {}]
  %s3 = sld [smem:[#allocation0]]
  $region65: #{tpu_custom_call.1} parent=0
    _
  %s5 = ssub.s32 1, %s3
  %s6 = scalar_select 0, %s5, %s3
  $region1: #{tpu_custom_call.1} parent=0
    #allocation3 [shape = 'u8[8192]{0}', space=vmem, size = 0x2000, scoped, tag = 'input window, operand 0']
    #allocation4 [shape = 's32[2]{0}', space=sflag, size = 0x8, scoped, tag = 'scoped memory for tpu_custom_call.1']
    #allocation5 [shape = 's32[2]{0}', space=sflag, size = 0x8, scoped, tag = 'scoped memory for tpu_custom_call.1']
    #allocation6 [shape = 'u8[8192]{0}', space=vmem, size = 0x2000, scoped, tag = 'input window, operand 1']
    #allocation7 [shape = 's32[2]{0}', space=sflag, size = 0x8, scoped, tag = 'scoped memory for tpu_custom_call.1']
    #allocation8 [shape = 'u8[8192]{0}', space=vmem, size = 0x2000, scoped, tag = 'output window, operand 0']
    %7 = vsyncpa [#allocation4], 0
    %s8 = scalar_lea.sflag [#allocation4], 1
    %9 = vsyncpa %s8, 0
    %10 = vsyncpa [#allocation7], 0
    %s11 = scalar_lea.sflag [#allocation7], 1
    %12 = vsyncpa %s11, 0
    %13 = vsyncpa [#allocation5], 0
    %s14 = scalar_lea.sflag [#allocation5], 1
    %15 = vsyncpa %s14, 0
    loop: start=0, step=1, limit=6
    $region2: #{tpu_custom_call.1} parent=1 // loop_pre_header
      _
    $region3: #{tpu_custom_call.1} parent=1 // loop_header
      %s17 = sphi 0, %s21
      %p18 = scmp.ge.s32.totalorder %s17, 6
      %s24 = sphi 0, %s36
      %s25 = sphi 0, %s32
      %s26 = sphi 0, %s24
      %s27 = sphi 0, %s25
      %s28 = sphi 0, %s26
      %s29 = sphi 0, %s27
      %s39 = sphi 0, %s41
      %s42 = sphi 0, %s39
      %s43 = sphi 0, %s42
      %s59 = sphi 0, %s43
      %s65 = sphi 0, %s67
      %s68 = sphi 0, %s65
      %s69 = sphi 0, %s68
      %s85 = sphi 0, %s69
      %s91 = sphi 0, %s93
      %s94 = sphi 0, %s91
      %s95 = sphi 0, %s94
      %s111 = sphi 0, %s95
    $region4: #{tpu_custom_call.1} parent=1 // loop_header_branch
      %20 = sbr.rel (%p18) target = $region8
    $region5: #{tpu_custom_call.1} parent=1 // loop_body
      %s22 = ssub.s32 %s17, 1
      %s23 = ssub.s32 %s17, 2
      %s30 = sadd.s32 1, %s25
      %p31 = scmp.ge.s32.totalorder %s30, 2
      %s32 = scalar_select %p31, 0, %s30
      %s33 = sadd.s32 1, %s24
      %s34 = scalar_select %p31, %s33, %s24
      %p35 = scmp.ge.s32.totalorder %s34, 2
      %s36 = scalar_select %p35, 0, %s34
      %s37 = ssub.s32 %s24, %s36
      %p38 = scmp.eq.s32.totalorder %s37, 0
      %s40 = sadd.s32 %s39, 1
      %s41 = scalar_select %p38, %s39, %s40
      %p44 = pneg %p38
      %p45 = scmp.eq.s32.totalorder %s17, 3
      %p46 = por %p44, %p45
      %p47 = scmp.ne.s32.totalorder %s39, %s42
      %p48 = scmp.eq.s32.totalorder %s17, 0
      %p49 = por %p47, %p48
      %p50 = scmp.ne.s32.totalorder %s39, %s42
      %p51 = scmp.eq.s32.totalorder %s22, 3
      %p52 = por %p50, %p51
      %p53 = scmp.ne.s32.totalorder %s42, %s43
      %p54 = scmp.eq.s32.totalorder %s22, 0
      %p55 = por %p53, %p54
      %p56 = scmp.ne.s32.totalorder %s42, %s43
      %p57 = scmp.eq.s32.totalorder %s23, 3
      %p58 = por %p56, %p57
      %p60 = scmp.ne.s32.totalorder %s43, %s59
      %p61 = scmp.eq.s32.totalorder %s23, 0
      %p62 = por %p60, %p61
      %s63 = ssub.s32 %s25, %s32
      %p64 = scmp.eq.s32.totalorder %s63, 0
      %s66 = sadd.s32 %s65, 1
      %s67 = scalar_select %p64, %s65, %s66
      %p70 = pneg %p64
      %p71 = scmp.eq.s32.totalorder %s17, 3
      %p72 = por %p70, %p71
      %p73 = scmp.ne.s32.totalorder %s65, %s68
      %p74 = scmp.eq.s32.totalorder %s17, 0
      %p75 = por %p73, %p74
      %p76 = scmp.ne.s32.totalorder %s65, %s68
      %p77 = scmp.eq.s32.totalorder %s22, 3
      %p78 = por %p76, %p77
      %p79 = scmp.ne.s32.totalorder %s68, %s69
      %p80 = scmp.eq.s32.totalorder %s22, 0
      %p81 = por %p79, %p80
      %p82 = scmp.ne.s32.totalorder %s68, %s69
      %p83 = scmp.eq.s32.totalorder %s23, 3
      %p84 = por %p82, %p83
      %p86 = scmp.ne.s32.totalorder %s69, %s85
      %p87 = scmp.eq.s32.totalorder %s23, 0
      %p88 = por %p86, %p87
      %s89 = ssub.s32 %s24, %s36
      %p90 = scmp.eq.s32.totalorder %s89, 0
      %s92 = sadd.s32 %s91, 1
      %s93 = scalar_select %p90, %s91, %s92
      %p96 = pneg %p90
      %p97 = scmp.eq.s32.totalorder %s17, 3
      %p98 = por %p96, %p97
      %p99 = scmp.ne.s32.totalorder %s91, %s94
      %p100 = scmp.eq.s32.totalorder %s17, 0
      %p101 = por %p99, %p100
      %p102 = scmp.ne.s32.totalorder %s91, %s94
      %p103 = scmp.eq.s32.totalorder %s22, 3
      %p104 = por %p102, %p103
      %p105 = scmp.ne.s32.totalorder %s94, %s95
      %p106 = scmp.eq.s32.totalorder %s22, 0
      %p107 = por %p105, %p106
      %p108 = scmp.ne.s32.totalorder %s94, %s95
      %p109 = scmp.eq.s32.totalorder %s23, 3
      %p110 = por %p108, %p109
      %p112 = scmp.ne.s32.totalorder %s95, %s111
      %p113 = scmp.eq.s32.totalorder %s23, 0
      %p114 = por %p112, %p113
      %p115 = scmp.le.s32.totalorder 1, %s17
      %p116 = scmp.lt.s32.totalorder %s17, 5
      %p117 = pnand %p115, %p116
      %p118 = pneg %p117
      // Predicated region
      $region9: #{tpu_custom_call.1} parent=5 // pred_check
        _
      $region10: #{tpu_custom_call.1} parent=5 // pred_check_branch
        %120 = sbr.rel (%p117) target = $region12
      $region11: #{tpu_custom_call.1} parent=5 // pred_region
        %s121 = ssub.s32 %s17, 1
      $region12: #{tpu_custom_call.1} parent=5 // pred_fallthru
        _
      %p122 = scmp.lt.s32.totalorder %s17, 4
      // Predicated region
      $region13: #{tpu_custom_call.1} parent=5 // pred_check
        %p123 = pneg %p122
      $region14: #{tpu_custom_call.1} parent=5 // pred_check_branch
        %125 = sbr.rel (%p123) target = $region16
      $region15: #{tpu_custom_call.1} parent=5 // pred_region
        // Predicated region
        $region17: #{tpu_custom_call.1} parent=15 // pred_check
          %p126 = pneg %p49
        $region18: #{tpu_custom_call.1} parent=15 // pred_check_branch
          %128 = sbr.rel (%p126) target = $region20
        $region19: #{tpu_custom_call.1} parent=15 // pred_region
          %s129 = sand.u32 %s39, 1
          %s130 = scalar_lea.sflag [#allocation4], %s129
          %s131 = sand.u32 %s39, 1
          %s132 = smul.addr %s131, 8
          %s133 = scalar_lea.vmem [#allocation3], %s132
          %s135 = ssub.s32 128, 128
          %136 = vsyncadd %s130, %s135
          %s137 = smul.addr %s24, 64
          %s138 = scalar_lea.hbm %s0, %s137
          %s139 = sshll.u32 %s133, 4
          %s140 = int_to_ptr.vmem [resolvable:$true] %s139
          %145 = dma.hbm_to_vmem [thread:$0]  %s138, 128, %s140, %s130, 128, 64, 4
        $region20: #{tpu_custom_call.1} parent=15 // pred_fallthru
          _
        // Predicated region
        $region21: #{tpu_custom_call.1} parent=15 // pred_check
          %p146 = pneg %p75
        $region22: #{tpu_custom_call.1} parent=15 // pred_check_branch
          %148 = sbr.rel (%p146) target = $region24
        $region23: #{tpu_custom_call.1} parent=15 // pred_region
          %s149 = sand.u32 %s65, 1
          %s150 = scalar_lea.sflag [#allocation7], %s149
          %s151 = sand.u32 %s65, 1
          %s152 = smul.addr %s151, 8
          %s153 = scalar_lea.vmem [#allocation6], %s152
          %s155 = ssub.s32 128, 128
          %156 = vsyncadd %s150, %s155
          %s157 = smul.addr %s25, 64
          %s158 = scalar_lea.hbm %s1, %s157
          %s159 = sshll.u32 %s153, 4
          %s160 = int_to_ptr.vmem [resolvable:$true] %s159
          %165 = dma.hbm_to_vmem [thread:$0]  %s158, 128, %s160, %s150, 128, 64, 4
        $region24: #{tpu_custom_call.1} parent=15 // pred_fallthru
          _
      $region16: #{tpu_custom_call.1} parent=5 // pred_fallthru
        _
      %p166 = scmp.le.s32.totalorder 1, %s17
      %p167 = scmp.lt.s32.totalorder %s17, 5
      %p168 = pnand %p166, %p167
      %p169 = pneg %p168
      // Predicated region
      $region25: #{tpu_custom_call.1} parent=5 // pred_check
        _
      $region26: #{tpu_custom_call.1} parent=5 // pred_check_branch
        %171 = sbr.rel (%p168) target = $region28
      $region27: #{tpu_custom_call.1} parent=5 // pred_region
        %s172 = ssub.s32 %s17, 1
        %s173 = sand.u32 %s42, 1
        %s174 = scalar_lea.sflag [#allocation4], %s173
        %s175 = sand.u32 %s42, 1
        %s176 = smul.addr %s175, 8
        %s177 = scalar_lea.vmem [#allocation3], %s176
        // Predicated region
        $region29: #{tpu_custom_call.1} parent=27 // pred_check
          %p178 = pneg %p55
        $region30: #{tpu_custom_call.1} parent=27 // pred_check_branch
          %180 = sbr.rel (%p178) target = $region32
        $region31: #{tpu_custom_call.1} parent=27 // pred_region
          %181 = dma.done %s174, 128
        $region32: #{tpu_custom_call.1} parent=27 // pred_fallthru
          _
        %s182 = sand.u32 %s68, 1
        %s183 = scalar_lea.sflag [#allocation7], %s182
        %s184 = sand.u32 %s68, 1
        %s185 = smul.addr %s184, 8
        %s186 = scalar_lea.vmem [#allocation6], %s185
        // Predicated region
        $region33: #{tpu_custom_call.1} parent=27 // pred_check
          %p187 = pneg %p81
        $region34: #{tpu_custom_call.1} parent=27 // pred_check_branch
          %189 = sbr.rel (%p187) target = $region36
        $region35: #{tpu_custom_call.1} parent=27 // pred_region
          %190 = dma.done %s183, 128
        $region36: #{tpu_custom_call.1} parent=27 // pred_fallthru
          _
        %s191 = sand.u32 %s42, 1
        %s192 = scalar_lea.sflag [#allocation4], %s191
        %s193 = sand.u32 %s42, 1
        %s194 = smul.addr %s193, 8
        %s195 = scalar_lea.vmem [#allocation3], %s194
        %p196 = pneg %p55
        %p197 = pneg %p52
        %s198 = sand.u32 %s68, 1
        %s199 = scalar_lea.sflag [#allocation7], %s198
        %s200 = sand.u32 %s68, 1
        %s201 = smul.addr %s200, 8
        %s202 = scalar_lea.vmem [#allocation6], %s201
        %p203 = pneg %p81
        %p204 = pneg %p78
        %p205 = pneg %p107
        %p206 = pneg %p104
        %s207 = sand.u32 %s94, 1
        %s208 = scalar_lea.sflag [#allocation5], %s207
        %s209 = sand.u32 %s94, 1
        %s210 = smul.addr %s209, 8
        %s211 = scalar_lea.vmem [#allocation8], %s210
        %p213 = scmp.eq.s32.totalorder %s27, 0
        // Predicated region
        $region37: #{tpu_custom_call.1} parent=27 // pred_check
          %p214 = pneg %p213
        $region38: #{tpu_custom_call.1} parent=27 // pred_check_branch
          %216 = sbr.rel (%p214) target = $region40
        $region39: #{tpu_custom_call.1} parent=27 // pred_region
          %vm217 = vcmask 0
          %218 = vst.msk [vmem:[#allocation2] sm:$0x1] %vm217, 0.0
        $region40: #{tpu_custom_call.1} parent=27 // pred_fallthru
          _
        %v219 = vld [vmem:[%s177] sm:$0xf]
        %v220 = vld [vmem:[%s177 + $0x4] sm:$0xf]
        %v221 = vld [vmem:[%s186] sm:$0xf]
        %v222 = vld [vmem:[%s186 + $0x4] sm:$0xf]
        %v225 = vunpack.c.l.b16 %v219
        %v226 = vunpack.c.l.b16 %v220
        %v227 = vpack.c.b16 %v226, %v225
        %229 = vxpose.xlu0.c.b16.start [1/8] %v227, 128
        %230 = vxpose.xlu0.c.b16.cont [2/8] 0, 128
        %231 = vxpose.xlu0.c.b16.cont [3/8] 0, 128
        %232 = vxpose.xlu0.c.b16.cont [4/8] 0, 128
        %233 = vxpose.xlu0.c.b16.cont [5/8] 0, 128
        %234 = vxpose.xlu0.c.b16.cont [6/8] 0, 128
        %235 = vxpose.xlu0.c.b16.cont [7/8] 0, 128
        %236 = vxpose.xlu0.c.b16.end [8/8] 0, 128
        %v237 = vpop.trf.xlu0
        %v238 = vpop.trf.xlu0
        %v239 = vpop.trf.xlu0
        %v240 = vpop.trf.xlu0
        %v241 = vpop.trf.xlu0
        %v242 = vpop.trf.xlu0
        %v243 = vpop.trf.xlu0
        %v244 = vpop.trf.xlu0
        %v247 = vunpack.c.l.b16 %v221
        %v248 = vunpack.c.l.b16 %v222
        %v249 = vpack.c.b16 %v248, %v247
        %vm251 = vcmask 130048
        %v253 = vsel %vm251, %v237, 0
        %v256 = vsel %vm251, %v238, 0
        %v259 = vsel %vm251, %v239, 0
        %v262 = vsel %vm251, %v240, 0
        %v265 = vsel %vm251, %v241, 0
        %v268 = vsel %vm251, %v242, 0
        %v271 = vsel %vm251, %v243, 0
        %v274 = vsel %vm251, %v244, 0
        %276 = vmatprep.subr.bf16.mxu0 0
        %277 = vmatpush1.bf16.msra.mxu0 %v249
        %278 = vmatprep.subr.bf16.mxu0 0
        %279 = vmatpush1.bf16.msra.mxu0 0
        %280 = vmatprep.subr.bf16.mxu0 0
        %281 = vmatpush1.bf16.msra.mxu0 0
        %282 = vmatprep.subr.bf16.mxu0 0
        %283 = vmatpush1.bf16.msra.mxu0 0
        %284 = vmatprep.subr.bf16.mxu0 0
        %285 = vmatpush1.bf16.msra.mxu0 0
        %286 = vmatprep.subr.bf16.mxu0 0
        %287 = vmatpush1.bf16.msra.mxu0 0
        %288 = vmatprep.subr.bf16.mxu0 0
        %289 = vmatpush1.bf16.msra.mxu0 0
        %290 = vmatprep.subr.bf16.mxu0 0
        %291 = vmatpush1.bf16.msra.mxu0 0
        %292 = vmatprep.subr.bf16.mxu0 0
        %293 = vmatpush1.bf16.msra.mxu0 0
        %294 = vmatprep.subr.bf16.mxu0 0
        %295 = vmatpush1.bf16.msra.mxu0 0
        %296 = vmatprep.subr.bf16.mxu0 0
        %297 = vmatpush1.bf16.msra.mxu0 0
        %298 = vmatprep.subr.bf16.mxu0 0
        %299 = vmatpush1.bf16.msra.mxu0 0
        %300 = vmatprep.subr.bf16.mxu0 0
        %301 = vmatpush1.bf16.msra.mxu0 0
        %302 = vmatprep.subr.bf16.mxu0 0
        %303 = vmatpush1.bf16.msra.mxu0 0
        %304 = vmatprep.subr.bf16.mxu0 0
        %305 = vmatpush1.bf16.msra.mxu0 0
        %306 = vmatprep.subr.bf16.mxu0 0
        %307 = vmatpush1.bf16.msra.mxu0 0
        %308 = vmatprep.mubr.bf16.mxu0 0
        %309 = vmatmul.mubr.bf16.gmra.mrb[0].mxu0 %v253
        %v310 = vpop.f32.mrb[0].mxu0
        %v311 = vadd.f32 0.0, %v310
        %v312 = vpop.f32.mrb[0].mxu0
        %v313 = vpop.f32.mrb[0].mxu0
        %v314 = vadd.f32 0.0, %v313
        %v315 = vpop.f32.mrb[0].mxu0
        %316 = vmatprep.mubr.bf16.mxu0 0
        %317 = vmatmul.mubr.bf16.gmra.mrb[0].mxu0 %v256
        %v318 = vpop.f32.mrb[0].mxu0
        %v319 = vadd.f32 0.0, %v318
        %v320 = vpop.f32.mrb[0].mxu0
        %v321 = vpop.f32.mrb[0].mxu0
        %v322 = vadd.f32 0.0, %v321
        %v323 = vpop.f32.mrb[0].mxu0
        %324 = vmatprep.mubr.bf16.mxu0 0
        %325 = vmatmul.mubr.bf16.gmra.mrb[0].mxu0 %v259
        %v326 = vpop.f32.mrb[0].mxu0
        %v327 = vadd.f32 0.0, %v326
        %v328 = vpop.f32.mrb[0].mxu0
        %v329 = vpop.f32.mrb[0].mxu0
        %v330 = vadd.f32 0.0, %v329
        %v331 = vpop.f32.mrb[0].mxu0
        %332 = vmatprep.mubr.bf16.mxu0 0
        %333 = vmatmul.mubr.bf16.gmra.mrb[0].mxu0 %v262
        %v334 = vpop.f32.mrb[0].mxu0
        %v335 = vadd.f32 0.0, %v334
        %v336 = vpop.f32.mrb[0].mxu0
        %v337 = vpop.f32.mrb[0].mxu0
        %v338 = vadd.f32 0.0, %v337
        %v339 = vpop.f32.mrb[0].mxu0
        %340 = vmatprep.mubr.bf16.mxu0 0
        %341 = vmatmul.mubr.bf16.gmra.mrb[0].mxu0 %v265
        %v342 = vpop.f32.mrb[0].mxu0
        %v343 = vadd.f32 0.0, %v342
        %v344 = vpop.f32.mrb[0].mxu0
        %v345 = vpop.f32.mrb[0].mxu0
        %v346 = vadd.f32 0.0, %v345
        %v347 = vpop.f32.mrb[0].mxu0
        %348 = vmatprep.mubr.bf16.mxu0 0
        %349 = vmatmul.mubr.bf16.gmra.mrb[0].mxu0 %v268
        %v350 = vpop.f32.mrb[0].mxu0
        %v351 = vadd.f32 0.0, %v350
        %v352 = vpop.f32.mrb[0].mxu0
        %v353 = vpop.f32.mrb[0].mxu0
        %v354 = vadd.f32 0.0, %v353
        %v355 = vpop.f32.mrb[0].mxu0
        %356 = vmatprep.mubr.bf16.mxu0 0
        %357 = vmatmul.mubr.bf16.gmra.mrb[0].mxu0 %v271
        %v358 = vpop.f32.mrb[0].mxu0
        %v359 = vadd.f32 0.0, %v358
        %v360 = vpop.f32.mrb[0].mxu0
        %v361 = vpop.f32.mrb[0].mxu0
        %v362 = vadd.f32 0.0, %v361
        %v363 = vpop.f32.mrb[0].mxu0
        %364 = vmatprep.mubr.bf16.mxu0 0
        %365 = vmatmul.mubr.bf16.gmra.mrb[0].mxu0 %v274
        %v366 = vpop.f32.mrb[0].mxu0
        %v367 = vadd.f32 0.0, %v366
        %v368 = vpop.f32.mrb[0].mxu0
        %v369 = vpop.f32.mrb[0].mxu0
        %v370 = vadd.f32 0.0, %v369
        %v371 = vpop.f32.mrb[0].mxu0
        %372 = vdwg.mxu0
        %v373 = vmul.f32 %v311, %v311
        %v374 = vmul.f32 %v314, %v314
        %v375 = vmul.f32 %v319, %v319
        %v376 = vmul.f32 %v322, %v322
        %v377 = vmul.f32 %v327, %v327
        %v378 = vmul.f32 %v330, %v330
        %v379 = vmul.f32 %v335, %v335
        %v380 = vmul.f32 %v338, %v338
        %v381 = vmul.f32 %v343, %v343
        %v382 = vmul.f32 %v346, %v346
        %v383 = vmul.f32 %v351, %v351
        %v384 = vmul.f32 %v354, %v354
        %v385 = vmul.f32 %v359, %v359
        %v386 = vmul.f32 %v362, %v362
        %v387 = vmul.f32 %v367, %v367
        %v388 = vmul.f32 %v370, %v370
        %v389 = vadd.f32 %v373, %v374
        %v390 = vadd.f32 %v389, %v375
        %v391 = vadd.f32 %v390, %v376
        %v392 = vadd.f32 %v391, %v377
        %v393 = vadd.f32 %v392, %v378
        %v394 = vadd.f32 %v393, %v379
        %v395 = vadd.f32 %v394, %v380
        %v396 = vadd.f32 %v395, %v381
        %v397 = vadd.f32 %v396, %v382
        %v398 = vadd.f32 %v397, %v383
        %v399 = vadd.f32 %v398, %v384
        %v400 = vadd.f32 %v399, %v385
        %v401 = vadd.f32 %v400, %v386
        %v402 = vadd.f32 %v401, %v387
        %v403 = vadd.f32 %v402, %v388
        %404 = vadd.xlane.f32.xlu0 %v403
        %v405 = vpop.xlane.xlu0 %404
        %v406 = vrot.slane %v405, 4
        %v407 = vadd.f32 %v405, %v406
        %v408 = vrot.slane %v407, 2
        %v409 = vadd.f32 %v407, %v408
        %v410 = vrot.slane %v409, 1
        %v411 = vadd.f32 %v409, %v410
        %s412 = vtos %v411
        %p413 = scmp.ne.s32.totalorder %s26, %s27
        // Predicated region
        $region41: #{tpu_custom_call.1} parent=27 // pred_check
          %p414 = pneg %p413
        $region42: #{tpu_custom_call.1} parent=27 // pred_check_branch
          %416 = sbr.rel (%p414) target = $region44
        $region43: #{tpu_custom_call.1} parent=27 // pred_region
          %v417 = vld [vmem:[#allocation2] sm:$0x1]
          %s418 = smul.f32 %s412, 0.000125
          %v419 = vstv %s418
          %v420 = vadd.f32 %v417, %v419
          %vm421 = vcmask 0
          %422 = vst.msk [vmem:[#allocation2] sm:$0x1] %vm421, %v420
        $region44: #{tpu_custom_call.1} parent=27 // pred_fallthru
          _
        %p423 = scmp.eq.s32.totalorder %s26, %s27
        // Predicated region
        $region45: #{tpu_custom_call.1} parent=27 // pred_check
          %p424 = pneg %p423
        $region46: #{tpu_custom_call.1} parent=27 // pred_check_branch
          %426 = sbr.rel (%p424) target = $region48
        $region47: #{tpu_custom_call.1} parent=27 // pred_region
          %v427 = vlaneseq
          %v428 = vshrl.u32 %v427, 7
          %v429 = vadd.s32 %v428, 8
          %v430 = vadd.s32 %v428, 16
          %v431 = vadd.s32 %v428, 24
          %v432 = vadd.s32 %v428, 32
          %v433 = vadd.s32 %v428, 40
          %v434 = vadd.s32 %v428, 48
          %v435 = vadd.s32 %v428, 56
          %v436 = vadd.s32 %v428, 64
          %v437 = vadd.s32 %v428, 72
          %v438 = vadd.s32 %v428, 80
          %v439 = vadd.s32 %v428, 88
          %v440 = vadd.s32 %v428, 96
          %v441 = vadd.s32 %v428, 104
          %v442 = vadd.s32 %v428, 112
          %v443 = vadd.s32 %v428, 120
          %v444 = vlaneseq
          %v445 = vand.u32 %v444, 127
          %vm446 = vcmp.eq.s32.totalorder %v428, %v445
          %vm447 = vcmp.eq.s32.totalorder %v429, %v445
          %vm448 = vcmp.eq.s32.totalorder %v430, %v445
          %vm449 = vcmp.eq.s32.totalorder %v431, %v445
          %vm450 = vcmp.eq.s32.totalorder %v432, %v445
          %vm451 = vcmp.eq.s32.totalorder %v433, %v445
          %vm452 = vcmp.eq.s32.totalorder %v434, %v445
          %vm453 = vcmp.eq.s32.totalorder %v435, %v445
          %vm454 = vcmp.eq.s32.totalorder %v436, %v445
          %vm455 = vcmp.eq.s32.totalorder %v437, %v445
          %vm456 = vcmp.eq.s32.totalorder %v438, %v445
          %vm457 = vcmp.eq.s32.totalorder %v439, %v445
          %vm458 = vcmp.eq.s32.totalorder %v440, %v445
          %vm459 = vcmp.eq.s32.totalorder %v441, %v445
          %vm460 = vcmp.eq.s32.totalorder %v442, %v445
          %vm461 = vcmp.eq.s32.totalorder %v443, %v445
          %v462 = vsel %vm446, %v311, 0.0
          %v463 = vsel %vm447, %v314, 0.0
          %v464 = vsel %vm448, %v319, 0.0
          %v465 = vsel %vm449, %v322, 0.0
          %v466 = vsel %vm450, %v327, 0.0
          %v467 = vsel %vm451, %v330, 0.0
          %v468 = vsel %vm452, %v335, 0.0
          %v469 = vsel %vm453, %v338, 0.0
          %v470 = vsel %vm454, %v343, 0.0
          %v471 = vsel %vm455, %v346, 0.0
          %v472 = vsel %vm456, %v351, 0.0
          %v473 = vsel %vm457, %v354, 0.0
          %v474 = vsel %vm458, %v359, 0.0
          %v475 = vsel %vm459, %v362, 0.0
          %v476 = vsel %vm460, %v367, 0.0
          %v477 = vsel %vm461, %v370, 0.0
          %v478 = vmul.f32 %v462, %v462
          %v479 = vmul.f32 %v463, %v463
          %v480 = vmul.f32 %v464, %v464
          %v481 = vmul.f32 %v465, %v465
          %v482 = vmul.f32 %v466, %v466
          %v483 = vmul.f32 %v467, %v467
          %v484 = vmul.f32 %v468, %v468
          %v485 = vmul.f32 %v469, %v469
          %v486 = vmul.f32 %v470, %v470
          %v487 = vmul.f32 %v471, %v471
          %v488 = vmul.f32 %v472, %v472
          %v489 = vmul.f32 %v473, %v473
          %v490 = vmul.f32 %v474, %v474
          %v491 = vmul.f32 %v475, %v475
          %v492 = vmul.f32 %v476, %v476
          %v493 = vmul.f32 %v477, %v477
          %v494 = vadd.f32 %v478, %v479
          %v495 = vadd.f32 %v494, %v480
          %v496 = vadd.f32 %v495, %v481
          %v497 = vadd.f32 %v496, %v482
          %v498 = vadd.f32 %v497, %v483
          %v499 = vadd.f32 %v498, %v484
          %v500 = vadd.f32 %v499, %v485
          %v501 = vadd.f32 %v500, %v486
          %v502 = vadd.f32 %v501, %v487
          %v503 = vadd.f32 %v502, %v488
          %v504 = vadd.f32 %v503, %v489
          %v505 = vadd.f32 %v504, %v490
          %v506 = vadd.f32 %v505, %v491
          %v507 = vadd.f32 %v506, %v492
          %v508 = vadd.f32 %v507, %v493
          %509 = vadd.xlane.f32.xlu0 %v508
          %v510 = vpop.xlane.xlu0 %509
          %v511 = vrot.slane %v510, 4
          %v512 = vadd.f32 %v510, %v511
          %v513 = vrot.slane %v512, 2
          %v514 = vadd.f32 %v512, %v513
          %v515 = vrot.slane %v514, 1
          %v516 = vadd.f32 %v514, %v515
          %s517 = vtos %v516
          %v518 = vadd.f32 %v462, %v463
          %v519 = vadd.f32 %v518, %v464
          %v520 = vadd.f32 %v519, %v465
          %v521 = vadd.f32 %v520, %v466
          %v522 = vadd.f32 %v521, %v467
          %v523 = vadd.f32 %v522, %v468
          %v524 = vadd.f32 %v523, %v469
          %v525 = vadd.f32 %v524, %v470
          %v526 = vadd.f32 %v525, %v471
          %v527 = vadd.f32 %v526, %v472
          %v528 = vadd.f32 %v527, %v473
          %v529 = vadd.f32 %v528, %v474
          %v530 = vadd.f32 %v529, %v475
          %v531 = vadd.f32 %v530, %v476
          %v532 = vadd.f32 %v531, %v477
          %533 = vadd.xlane.f32.xlu0 %v532
          %v534 = vpop.xlane.xlu0 %533
          %v535 = vrot.slane %v534, 4
          %v536 = vadd.f32 %v534, %v535
          %v537 = vrot.slane %v536, 2
          %v538 = vadd.f32 %v536, %v537
          %v539 = vrot.slane %v538, 1
          %v540 = vadd.f32 %v538, %v539
          %s541 = vtos %v540
          %s542 = smul.u32 %s26, 128
          %s543 = ssub.s32 256, %s542
          %p544 = scmp.lt.s32.totalorder %s543, 128
          %s545 = scalar_select %p544, %s543, 128
          %s546 = scvt.s32.f32 %s545
          %s547 = smul.f32 %s541, 2.0
          %s548 = ssub.f32 %s517, %s547
          %s549 = sadd.f32 %s548, %s546
          %s550 = ssub.f32 %s412, %s517
          %v551 = vld [vmem:[#allocation2] sm:$0x1]
          %s552 = smul.f32 %s549, 0.025
          %s553 = smul.f32 %s550, 0.000125
          %s554 = sadd.f32 %s552, %s553
          %v555 = vstv %s554
          %v556 = vadd.f32 %v551, %v555
          %vm557 = vcmask 0
          %558 = vst.msk [vmem:[#allocation2] sm:$0x1] %vm557, %v556
        $region48: #{tpu_custom_call.1} parent=27 // pred_fallthru
          _
        %p559 = scmp.eq.s32.totalorder %s27, 1
        // Predicated region
        $region49: #{tpu_custom_call.1} parent=27 // pred_check
          %p560 = pneg %p559
        $region50: #{tpu_custom_call.1} parent=27 // pred_check_branch
          %562 = sbr.rel (%p560) target = $region52
        $region51: #{tpu_custom_call.1} parent=27 // pred_region
          %v563 = vld [vmem:[#allocation2] sm:$0x1]
          %v565 = vlaneseq
          %v566 = vshrl.u32 %v565, 7
          %v567 = vsub.s32 0, %v566
          %v568 = vrot.slane %v563, %v567
          %569 = vset.pattern.permute.xlu0 0
          %570 = vperm.xlu0 %569, %v568
          %v571 = vpop.permute.xlu0 %570
          %573 = vst [vmem:[%s211] sm:$0xff] %v571
        $region52: #{tpu_custom_call.1} parent=27 // pred_fallthru
          _
        %s574 = sand.u32 %s94, 1
        %s575 = scalar_lea.sflag [#allocation5], %s574
        %s576 = sand.u32 %s94, 1
        %s577 = smul.addr %s576, 8
        %s578 = scalar_lea.vmem [#allocation8], %s577
        // Predicated region
        $region53: #{tpu_custom_call.1} parent=27 // pred_check
          %p579 = pneg %p104
        $region54: #{tpu_custom_call.1} parent=27 // pred_check_branch
          %581 = sbr.rel (%p579) target = $region56
        $region55: #{tpu_custom_call.1} parent=27 // pred_region
          %s583 = ssub.s32 128, 128
          %584 = vsyncadd %s575, %s583
          %s585 = smul.addr %s26, 128
          %s586 = scalar_lea.hbm %s2, %s585
          %s588 = sshll.u32 %s578, 4
          %s589 = int_to_ptr.vmem [resolvable:$true] %s588
          %591 = dma.vmem_to_hbm [thread:$0]  %s589, 128, %s586, %s575
        $region56: #{tpu_custom_call.1} parent=27 // pred_fallthru
          _
      $region28: #{tpu_custom_call.1} parent=5 // pred_fallthru
        _
      %p592 = scmp.le.s32.totalorder 2, %s17
      // Predicated region
      $region57: #{tpu_custom_call.1} parent=5 // pred_check
        %p593 = pneg %p592
      $region58: #{tpu_custom_call.1} parent=5 // pred_check_branch
        %595 = sbr.rel (%p593) target = $region60
      $region59: #{tpu_custom_call.1} parent=5 // pred_region
        %s596 = ssub.s32 %s17, 2
        // Predicated region
        $region61: #{tpu_custom_call.1} parent=59 // pred_check
          %p597 = pneg %p110
        $region62: #{tpu_custom_call.1} parent=59 // pred_check_branch
          %599 = sbr.rel (%p597) target = $region64
        $region63: #{tpu_custom_call.1} parent=59 // pred_region
          %s600 = sand.u32 %s95, 1
          %s601 = scalar_lea.sflag [#allocation5], %s600
          %s602 = sand.u32 %s95, 1
          %s603 = smul.addr %s602, 8
          %s604 = scalar_lea.vmem [#allocation8], %s603
          %605 = dma.done %s601, 128
        $region64: #{tpu_custom_call.1} parent=59 // pred_fallthru
          _
      $region60: #{tpu_custom_call.1} parent=5 // pred_fallthru
        _
    $region6: #{tpu_custom_call.1} parent=1 // loop_footer
      %s21 = sadd.s32 1, %s17
    $region7: #{tpu_custom_call.1} parent=1 // loop_footer_branch
      %16 = sbr.rel target = $region3
    $region8: #{tpu_custom_call.1} parent=1 // loop_exit
      _
    %606 = vsyncpa [#allocation4], 1
    %s607 = scalar_lea.sflag [#allocation4], 1
    %608 = vsyncpa %s607, 1
    %609 = vsyncpa [#allocation7], 1
    %s610 = scalar_lea.sflag [#allocation7], 1
    %611 = vsyncpa %s610, 1
    %612 = vsyncpa [#allocation5], 1
    %s613 = scalar_lea.sflag [#allocation5], 1
    %614 = vsyncpa %s613, 1

</llo_original>
